<compile_context>
chip_gen: v6e
topology: v6e:2x2x1
jax: 0.10.0
libtpu: 0.0.40
codegen_flags: <defaults>
</compile_context>

<pallas_src>
import math

import jax
import jax.numpy as jnp
from jax.experimental import pallas as pl
from jax.experimental.pallas import tpu as pltpu

HIDDEN1 = 128   # fc1 out
HIDDEN2 = 64    # fc2 out
EMBED = 32      # fc3 out
PACK = 4        # rows packed per 128-lane output row
PACKED_W = PACK * EMBED   # = 128 -> lane-dense output stores / DMAs


def _round_up(n, m):
    return (n + m - 1) // m * m


# ------------------------------ Pallas kernel ------------------------------ #
def _encoder_stacked_kernel(x_ref, w1_ref, b1_ref, w2_ref, b2_ref,
                            w3_ref, b3_ref, out_ref):
    """One [tile_m, d_in] row-tile of  fc3(relu(fc2(relu(fc1(x))))).

    The tile is split into PACK contiguous row-quarters; quarter g's [q, 32]
    result lands in lanes [32g, 32g+32) of the [q, 128] output block, so the
    output is stored/written back lane-dense.  Rows are independent, so
    garbage rows of a ragged last block only pollute their own (discarded)
    outputs.
    """
    q = out_ref.shape[0]                       # tile_m // PACK
    # Read weights/biases once per tile (JAX does not CSE broadcast_in_dim).
    w1 = w1_ref[...]
    w2 = w2_ref[...]
    w3 = w3_ref[...]
    b1 = b1_ref[...]                           # biases kept f32 on purpose
    b2 = b2_ref[...]
    b3 = b3_ref[...]

    for g in range(PACK):                      # static 4-way unroll
        # x arrives f32 straight from HBM; bf16 cast happens on the VPU
        # (huge slack) instead of as a separate XLA op in HBM.
        xg = x_ref[g * q:(g + 1) * q, :].astype(jnp.bfloat16)

        # fc1 + ReLU   (MXU bf16 x bf16 -> f32 accumulate; ReLU in f32)
        h = jnp.dot(xg, w1, preferred_element_type=jnp.float32) + b1
        h = jnp.maximum(h, 0.0)

        # fc2 + ReLU
        h = jnp.dot(h.astype(jnp.bfloat16), w2,
                    preferred_element_type=jnp.float32) + b2
        h = jnp.maximum(h, 0.0)

        # fc3 (no activation)
        y = jnp.dot(h.astype(jnp.bfloat16), w3,
                    preferred_element_type=jnp.float32) + b3

        out_ref[:, g * EMBED:(g + 1) * EMBED] = y.astype(out_ref.dtype)


# ------------------------------ tile selection ------------------------------ #
def _choose_tile_m(rows, d_in, max_tile_m=2048):
    """Row tile: multiple of 128, big enough to amortize the ~0.35us/step grid
    overhead, small enough that the double-buffered f32 x tile stays well under
    every generation's default scoped VMEM (v5e 16 MiB, v6e/v7x 32 MiB), and
    preferring an even step count so v7x's 2 TensorCores stay balanced."""
    vmem_rows = (8 << 20) // max(1, 2 * d_in * 4)        # ~8 MiB x double-buffer
    cap = max(128, min(max_tile_m, (vmem_rows // 128) * 128))
    rows128 = _round_up(rows, 128)
    if rows128 <= cap:
        if rows128 >= 256:
            return min(cap, _round_up(pl.cdiv(rows, 2), 128))   # 2 steps
        return rows128                                          # single 128-row step
    tile = cap
    steps = pl.cdiv(rows, tile)
    if steps % 2 == 1 and steps >= 3:                    # nudge to an even step count
        alt = _round_up(pl.cdiv(rows, steps + 1), 128)
        if 0 < alt <= cap:
            tile = alt
    return tile


# --------------------------------- wrapper ---------------------------------- #
def encoder_stacked_forward(x, params, *, n_timesteps, n_features,
                            max_tile_m=2048):
    w1, b1, w2, b2, w3, b3 = params
    B = x.shape[0]
    d_in = w1.shape[0]                     # n_timesteps * n_features

    # Exactly what the torch forward does: reshape to (B, n_features, n_timesteps).
    x3 = x.reshape(B, n_features, n_timesteps)
    if x3.shape[-1] != d_in:
        raise ValueError(
            "fc1 in_features must equal the trailing dim after the reshape "
            "(the original module is only consistent for n_features == 1).")

    rows = B * n_features
    # No padding, no dtype cast here: either would be an extra full HBM round
    # trip of the input.  Pallas masks the ragged last row-block.
    x2 = x3.reshape(rows, d_in)

    tile_m = _choose_tile_m(rows, d_in, max_tile_m)
    num_tiles = pl.cdiv(rows, tile_m)
    q = tile_m // PACK                      # multiple of 32 (tile_m multiple of 128)

    out_packed = pl.pallas_call(
        _encoder_stacked_kernel,
        out_shape=jax.ShapeDtypeStruct((num_tiles * q, PACKED_W), jnp.float32),
        grid=(num_tiles,),
        in_specs=[
            pl.BlockSpec((tile_m, d_in), lambda i: (i, 0)),     # x tile advances
            pl.BlockSpec((d_in, HIDDEN1), lambda i: (0, 0)),    # weights / biases stay
            pl.BlockSpec((1, HIDDEN1), lambda i: (0, 0)),       #   VMEM-resident
            pl.BlockSpec((HIDDEN1, HIDDEN2), lambda i: (0, 0)),
            pl.BlockSpec((1, HIDDEN2), lambda i: (0, 0)),
            pl.BlockSpec((HIDDEN2, EMBED), lambda i: (0, 0)),
            pl.BlockSpec((1, EMBED), lambda i: (0, 0)),
        ],
        out_specs=pl.BlockSpec((q, PACKED_W), lambda i: (i, 0)),
        compiler_params=pltpu.CompilerParams(
            dimension_semantics=("parallel",)),   # v7x: rows split across 2 TCs
    )(x2, w1, b1, w2, b2, w3, b3)

    # Undo the 4-rows-per-128-lane packing.  This is layout plumbing on the
    # (tiny) output only: reshape + transpose over rows*32 floats.
    out = out_packed.reshape(num_tiles, q, PACK, EMBED)
    out = jnp.transpose(out, (0, 2, 1, 3)).reshape(num_tiles * tile_m, EMBED)
    return out[:rows].reshape(B, n_features, EMBED)


# --------------------------- deterministic init ------------------------------ #
def _linear_init(key, fan_in, fan_out, w_dtype=jnp.bfloat16):
    """torch.nn.Linear default init: U(-1/sqrt(fan_in), 1/sqrt(fan_in))."""
    kw, kb = jax.random.split(key)
    bound = 1.0 / math.sqrt(fan_in)
    w = jax.random.uniform(kw, (fan_in, fan_out), jnp.float32, -bound, bound)
    b = jax.random.uniform(kb, (1, fan_out), jnp.float32, -bound, bound)
    # Intentional asymmetry: bf16 weights (MXU rate / DMA bytes), f32 biases.
    return w.astype(w_dtype), b


def make_params(key, n_timesteps, n_features):
    k1, k2, k3 = jax.random.split(key, 3)
    w1, b1 = _linear_init(k1, n_timesteps * n_features, HIDDEN1)
    w2, b2 = _linear_init(k2, HIDDEN1, HIDDEN2)
    w3, b3 = _linear_init(k3, HIDDEN2, EMBED)
    return (w1, b1, w2, b2, w3, b3)


# -------------------------------- reference ---------------------------------- #
def reference_forward(x, params, *, n_timesteps, n_features,
                      matmul_dtype=jnp.bfloat16):
    w1, b1, w2, b2, w3, b3 = params
    B = x.shape[0]
    x3 = x.reshape(B, n_features, n_timesteps)

    def lin(a, w, b):
        return jnp.dot(a.astype(matmul_dtype), w.astype(matmul_dtype),
                       preferred_element_type=jnp.float32) + b

    h = jnp.maximum(lin(x3, w1, b1), 0.0)
    h = jnp.maximum(lin(h, w2, b2), 0.0)
    return lin(h, w3, b3)


# ----------------------------------- main ------------------------------------ #
if __name__ == "__main__":
    key = jax.random.PRNGKey(0)
    k_x, k_p, k_x2 = jax.random.split(key, 3)

    # Small demo shapes implied by the module (n_features must be 1 for the
    # reshape + fc1 dimensions to line up, as in the original torch code).
    B, N_TIMESTEPS, N_FEATURES = 2, 128, 1

    params = make_params(k_p, N_TIMESTEPS, N_FEATURES)
    x = jax.random.normal(k_x, (B, N_TIMESTEPS, N_FEATURES), jnp.float32)

    out = encoder_stacked_forward(x, params,
                                  n_timesteps=N_TIMESTEPS, n_features=N_FEATURES)
    out = jax.block_until_ready(out)
    assert out.shape == (B, N_FEATURES, EMBED)

    ref_bf16 = reference_forward(x, params, n_timesteps=N_TIMESTEPS,
                                 n_features=N_FEATURES, matmul_dtype=jnp.bfloat16)
    ref_f32 = reference_forward(x, params, n_timesteps=N_TIMESTEPS,
                                n_features=N_FEATURES, matmul_dtype=jnp.float32)
    assert jnp.max(jnp.abs(out - ref_bf16)) < 1e-2, "mismatch vs bf16 reference"
    assert jnp.max(jnp.abs(out - ref_f32)) < 5e-2, "mismatch vs f32 reference"

    # Larger batch exercises the row grid (ragged last tile handled by Pallas
    # block masking; weights stay VMEM-resident across grid steps).
    B2 = 600
    x_big = jax.random.normal(k_x2, (B2, N_TIMESTEPS, N_FEATURES), jnp.float32)
    out_big = jax.block_until_ready(
        encoder_stacked_forward(x_big, params,
                                n_timesteps=N_TIMESTEPS, n_features=N_FEATURES))
    ref_big = reference_forward(x_big, params, n_timesteps=N_TIMESTEPS,
                                n_features=N_FEATURES, matmul_dtype=jnp.bfloat16)
    assert out_big.shape == (B2, N_FEATURES, EMBED)
    assert jnp.max(jnp.abs(out_big - ref_big)) < 1e-2, "mismatch on large batch"

    print("KERNEL_OK")
</pallas_src>

<mosaic_0001>
module attributes {stable_mosaic.version = 11 : i64} {
  func.func @_encoder_stacked_kernel(%arg0: i32, %arg1: memref<128x128xf32, #tpu.memory_space<vmem>>, %arg2: memref<128x128xbf16, #tpu.memory_space<vmem>>, %arg3: memref<1x128xf32, #tpu.memory_space<vmem>>, %arg4: memref<128x64xbf16, #tpu.memory_space<vmem>>, %arg5: memref<1x64xf32, #tpu.memory_space<vmem>>, %arg6: memref<64x32xbf16, #tpu.memory_space<vmem>>, %arg7: memref<1x32xf32, #tpu.memory_space<vmem>>, %arg8: memref<32x128xf32, #tpu.memory_space<vmem>>) attributes {dimension_semantics = [#tpu.dimension_semantics<parallel>], iteration_bounds = array<i64: 1>, scalar_prefetch = 0 : i64, scratch_operands = 0 : i64, tpu.core_type = #tpu.core_type<tc>, window_params = [{transform_indices = @transform_0, window_bounds = array<i64: 128, 128>}, {pipeline_mode = #tpu.pipeline_mode<synchronous>, transform_indices = @transform_1, window_bounds = array<i64: 128, 128>}, {pipeline_mode = #tpu.pipeline_mode<synchronous>, transform_indices = @transform_2, window_bounds = array<i64: 1, 128>}, {pipeline_mode = #tpu.pipeline_mode<synchronous>, transform_indices = @transform_3, window_bounds = array<i64: 128, 64>}, {pipeline_mode = #tpu.pipeline_mode<synchronous>, transform_indices = @transform_4, window_bounds = array<i64: 1, 64>}, {pipeline_mode = #tpu.pipeline_mode<synchronous>, transform_indices = @transform_5, window_bounds = array<i64: 64, 32>}, {pipeline_mode = #tpu.pipeline_mode<synchronous>, transform_indices = @transform_6, window_bounds = array<i64: 1, 32>}, {transform_indices = @transform_7, window_bounds = array<i64: 32, 128>}]} {
    %c0 = arith.constant 0 : index
    %c0_0 = arith.constant 0 : index
    %0 = vector.load %arg2[%c0, %c0_0] : memref<128x128xbf16, #tpu.memory_space<vmem>>, vector<128x128xbf16>
    %c0_1 = arith.constant 0 : index
    %c0_2 = arith.constant 0 : index
    %1 = vector.load %arg4[%c0_1, %c0_2] : memref<128x64xbf16, #tpu.memory_space<vmem>>, vector<128x64xbf16>
    %c0_3 = arith.constant 0 : index
    %c0_4 = arith.constant 0 : index
    %2 = vector.load %arg6[%c0_3, %c0_4] : memref<64x32xbf16, #tpu.memory_space<vmem>>, vector<64x32xbf16>
    %c0_5 = arith.constant 0 : index
    %c0_6 = arith.constant 0 : index
    %3 = vector.load %arg3[%c0_5, %c0_6] : memref<1x128xf32, #tpu.memory_space<vmem>>, vector<1x128xf32>
    %c0_7 = arith.constant 0 : index
    %c0_8 = arith.constant 0 : index
    %4 = vector.load %arg5[%c0_7, %c0_8] : memref<1x64xf32, #tpu.memory_space<vmem>>, vector<1x64xf32>
    %c0_9 = arith.constant 0 : index
    %c0_10 = arith.constant 0 : index
    %5 = vector.load %arg7[%c0_9, %c0_10] : memref<1x32xf32, #tpu.memory_space<vmem>>, vector<1x32xf32>
    %c0_11 = arith.constant 0 : index
    %c0_12 = arith.constant 0 : index
    %6 = vector.load %arg1[%c0_11, %c0_12] : memref<128x128xf32, #tpu.memory_space<vmem>>, vector<32x128xf32>
    %7 = arith.truncf %6 : vector<32x128xf32> to vector<32x128xbf16>
    %cst = arith.constant dense<0.000000e+00> : vector<32x128xf32>
    %8 = tpu.matmul %7, %0, %cst {dimension_numbers = #tpu.dot_dimension_numbers<[1], [0], [0], [1], [0, 0, 1, 1], [], []>} : vector<32x128xbf16>, vector<128x128xbf16>, vector<32x128xf32> -> vector<32x128xf32>
    %9 = vector.broadcast %3 : vector<1x128xf32> to vector<32x128xf32>
    %10 = arith.addf %8, %9 : vector<32x128xf32>
    %cst_13 = arith.constant 0.000000e+00 : f32
    %11 = vector.broadcast %cst_13 : f32 to vector<32x128xf32>
    %12 = arith.maximumf %10, %11 : vector<32x128xf32>
    %13 = arith.truncf %12 : vector<32x128xf32> to vector<32x128xbf16>
    %cst_14 = arith.constant dense<0.000000e+00> : vector<32x64xf32>
    %14 = tpu.matmul %13, %1, %cst_14 {dimension_numbers = #tpu.dot_dimension_numbers<[1], [0], [0], [1], [0, 0, 1, 1], [], []>} : vector<32x128xbf16>, vector<128x64xbf16>, vector<32x64xf32> -> vector<32x64xf32>
    %15 = vector.broadcast %4 : vector<1x64xf32> to vector<32x64xf32>
    %16 = arith.addf %14, %15 : vector<32x64xf32>
    %cst_15 = arith.constant 0.000000e+00 : f32
    %17 = vector.broadcast %cst_15 : f32 to vector<32x64xf32>
    %18 = arith.maximumf %16, %17 : vector<32x64xf32>
    %19 = arith.truncf %18 : vector<32x64xf32> to vector<32x64xbf16>
    %cst_16 = arith.constant dense<0.000000e+00> : vector<32x32xf32>
    %20 = tpu.matmul %19, %2, %cst_16 {dimension_numbers = #tpu.dot_dimension_numbers<[1], [0], [0], [1], [0, 0, 1, 1], [], []>} : vector<32x64xbf16>, vector<64x32xbf16>, vector<32x32xf32> -> vector<32x32xf32>
    %21 = vector.broadcast %5 : vector<1x32xf32> to vector<32x32xf32>
    %22 = arith.addf %20, %21 : vector<32x32xf32>
    %c0_17 = arith.constant 0 : index
    %c0_18 = arith.constant 0 : index
    %23 = vector.load %arg8[%c0_17, %c0_18] : memref<32x128xf32, #tpu.memory_space<vmem>>, vector<32x32xf32>
    tpu.vector_store %arg8[%c0_17, %c0_18], %22 {strides = array<i32>} : memref<32x128xf32, #tpu.memory_space<vmem>>, vector<32x32xf32>,
    %c32 = arith.constant 32 : index
    %c0_19 = arith.constant 0 : index
    %24 = vector.load %arg1[%c32, %c0_19] : memref<128x128xf32, #tpu.memory_space<vmem>>, vector<32x128xf32>
    %25 = arith.truncf %24 : vector<32x128xf32> to vector<32x128xbf16>
    %cst_20 = arith.constant dense<0.000000e+00> : vector<32x128xf32>
    %26 = tpu.matmul %25, %0, %cst_20 {dimension_numbers = #tpu.dot_dimension_numbers<[1], [0], [0], [1], [0, 0, 1, 1], [], []>} : vector<32x128xbf16>, vector<128x128xbf16>, vector<32x128xf32> -> vector<32x128xf32>
    %27 = vector.broadcast %3 : vector<1x128xf32> to vector<32x128xf32>
    %28 = arith.addf %26, %27 : vector<32x128xf32>
    %cst_21 = arith.constant 0.000000e+00 : f32
    %29 = vector.broadcast %cst_21 : f32 to vector<32x128xf32>
    %30 = arith.maximumf %28, %29 : vector<32x128xf32>
    %31 = arith.truncf %30 : vector<32x128xf32> to vector<32x128xbf16>
    %cst_22 = arith.constant dense<0.000000e+00> : vector<32x64xf32>
    %32 = tpu.matmul %31, %1, %cst_22 {dimension_numbers = #tpu.dot_dimension_numbers<[1], [0], [0], [1], [0, 0, 1, 1], [], []>} : vector<32x128xbf16>, vector<128x64xbf16>, vector<32x64xf32> -> vector<32x64xf32>
    %33 = vector.broadcast %4 : vector<1x64xf32> to vector<32x64xf32>
    %34 = arith.addf %32, %33 : vector<32x64xf32>
    %cst_23 = arith.constant 0.000000e+00 : f32
    %35 = vector.broadcast %cst_23 : f32 to vector<32x64xf32>
    %36 = arith.maximumf %34, %35 : vector<32x64xf32>
    %37 = arith.truncf %36 : vector<32x64xf32> to vector<32x64xbf16>
    %cst_24 = arith.constant dense<0.000000e+00> : vector<32x32xf32>
    %38 = tpu.matmul %37, %2, %cst_24 {dimension_numbers = #tpu.dot_dimension_numbers<[1], [0], [0], [1], [0, 0, 1, 1], [], []>} : vector<32x64xbf16>, vector<64x32xbf16>, vector<32x32xf32> -> vector<32x32xf32>
    %39 = vector.broadcast %5 : vector<1x32xf32> to vector<32x32xf32>
    %40 = arith.addf %38, %39 : vector<32x32xf32>
    %c0_25 = arith.constant 0 : index
    %c32_26 = arith.constant 32 : index
    %41 = vector.load %arg8[%c0_25, %c32_26] : memref<32x128xf32, #tpu.memory_space<vmem>>, vector<32x32xf32>
    tpu.vector_store %arg8[%c0_25, %c32_26], %40 {strides = array<i32>} : memref<32x128xf32, #tpu.memory_space<vmem>>, vector<32x32xf32>,
    %c64 = arith.constant 64 : index
    %c0_27 = arith.constant 0 : index
    %42 = vector.load %arg1[%c64, %c0_27] : memref<128x128xf32, #tpu.memory_space<vmem>>, vector<32x128xf32>
    %43 = arith.truncf %42 : vector<32x128xf32> to vector<32x128xbf16>
    %cst_28 = arith.constant dense<0.000000e+00> : vector<32x128xf32>
    %44 = tpu.matmul %43, %0, %cst_28 {dimension_numbers = #tpu.dot_dimension_numbers<[1], [0], [0], [1], [0, 0, 1, 1], [], []>} : vector<32x128xbf16>, vector<128x128xbf16>, vector<32x128xf32> -> vector<32x128xf32>
    %45 = vector.broadcast %3 : vector<1x128xf32> to vector<32x128xf32>
    %46 = arith.addf %44, %45 : vector<32x128xf32>
    %cst_29 = arith.constant 0.000000e+00 : f32
    %47 = vector.broadcast %cst_29 : f32 to vector<32x128xf32>
    %48 = arith.maximumf %46, %47 : vector<32x128xf32>
    %49 = arith.truncf %48 : vector<32x128xf32> to vector<32x128xbf16>
    %cst_30 = arith.constant dense<0.000000e+00> : vector<32x64xf32>
    %50 = tpu.matmul %49, %1, %cst_30 {dimension_numbers = #tpu.dot_dimension_numbers<[1], [0], [0], [1], [0, 0, 1, 1], [], []>} : vector<32x128xbf16>, vector<128x64xbf16>, vector<32x64xf32> -> vector<32x64xf32>
    %51 = vector.broadcast %4 : vector<1x64xf32> to vector<32x64xf32>
    %52 = arith.addf %50, %51 : vector<32x64xf32>
    %cst_31 = arith.constant 0.000000e+00 : f32
    %53 = vector.broadcast %cst_31 : f32 to vector<32x64xf32>
    %54 = arith.maximumf %52, %53 : vector<32x64xf32>
    %55 = arith.truncf %54 : vector<32x64xf32> to vector<32x64xbf16>
    %cst_32 = arith.constant dense<0.000000e+00> : vector<32x32xf32>
    %56 = tpu.matmul %55, %2, %cst_32 {dimension_numbers = #tpu.dot_dimension_numbers<[1], [0], [0], [1], [0, 0, 1, 1], [], []>} : vector<32x64xbf16>, vector<64x32xbf16>, vector<32x32xf32> -> vector<32x32xf32>
    %57 = vector.broadcast %5 : vector<1x32xf32> to vector<32x32xf32>
    %58 = arith.addf %56, %57 : vector<32x32xf32>
    %c0_33 = arith.constant 0 : index
    %c64_34 = arith.constant 64 : index
    %59 = vector.load %arg8[%c0_33, %c64_34] : memref<32x128xf32, #tpu.memory_space<vmem>>, vector<32x32xf32>
    tpu.vector_store %arg8[%c0_33, %c64_34], %58 {strides = array<i32>} : memref<32x128xf32, #tpu.memory_space<vmem>>, vector<32x32xf32>,
    %c96 = arith.constant 96 : index
    %c0_35 = arith.constant 0 : index
    %60 = vector.load %arg1[%c96, %c0_35] : memref<128x128xf32, #tpu.memory_space<vmem>>, vector<32x128xf32>
    %61 = arith.truncf %60 : vector<32x128xf32> to vector<32x128xbf16>
    %cst_36 = arith.constant dense<0.000000e+00> : vector<32x128xf32>
    %62 = tpu.matmul %61, %0, %cst_36 {dimension_numbers = #tpu.dot_dimension_numbers<[1], [0], [0], [1], [0, 0, 1, 1], [], []>} : vector<32x128xbf16>, vector<128x128xbf16>, vector<32x128xf32> -> vector<32x128xf32>
    %63 = vector.broadcast %3 : vector<1x128xf32> to vector<32x128xf32>
    %64 = arith.addf %62, %63 : vector<32x128xf32>
    %cst_37 = arith.constant 0.000000e+00 : f32
    %65 = vector.broadcast %cst_37 : f32 to vector<32x128xf32>
    %66 = arith.maximumf %64, %65 : vector<32x128xf32>
    %67 = arith.truncf %66 : vector<32x128xf32> to vector<32x128xbf16>
    %cst_38 = arith.constant dense<0.000000e+00> : vector<32x64xf32>
    %68 = tpu.matmul %67, %1, %cst_38 {dimension_numbers = #tpu.dot_dimension_numbers<[1], [0], [0], [1], [0, 0, 1, 1], [], []>} : vector<32x128xbf16>, vector<128x64xbf16>, vector<32x64xf32> -> vector<32x64xf32>
    %69 = vector.broadcast %4 : vector<1x64xf32> to vector<32x64xf32>
    %70 = arith.addf %68, %69 : vector<32x64xf32>
    %cst_39 = arith.constant 0.000000e+00 : f32
    %71 = vector.broadcast %cst_39 : f32 to vector<32x64xf32>
    %72 = arith.maximumf %70, %71 : vector<32x64xf32>
    %73 = arith.truncf %72 : vector<32x64xf32> to vector<32x64xbf16>
    %cst_40 = arith.constant dense<0.000000e+00> : vector<32x32xf32>
    %74 = tpu.matmul %73, %2, %cst_40 {dimension_numbers = #tpu.dot_dimension_numbers<[1], [0], [0], [1], [0, 0, 1, 1], [], []>} : vector<32x64xbf16>, vector<64x32xbf16>, vector<32x32xf32> -> vector<32x32xf32>
    %75 = vector.broadcast %5 : vector<1x32xf32> to vector<32x32xf32>
    %76 = arith.addf %74, %75 : vector<32x32xf32>
    %c0_41 = arith.constant 0 : index
    %c96_42 = arith.constant 96 : index
    %77 = vector.load %arg8[%c0_41, %c96_42] : memref<32x128xf32, #tpu.memory_space<vmem>>, vector<32x32xf32>
    tpu.vector_store %arg8[%c0_41, %c96_42], %76 {strides = array<i32>} : memref<32x128xf32, #tpu.memory_space<vmem>>, vector<32x32xf32>,
    return
  }
  func.func @transform_0(%arg0: i32) -> (i32, i32) {
    %c0_i32 = arith.constant 0 : i32
    %c0_i32_0 = arith.constant 0 : i32
    return %arg0, %c0_i32 : i32, i32
  }
  func.func @transform_1(%arg0: i32) -> (i32, i32) {
    %c0_i32 = arith.constant 0 : i32
    %c0_i32_0 = arith.constant 0 : i32
    %c0_i32_1 = arith.constant 0 : i32
    return %c0_i32, %c0_i32_0 : i32, i32
  }
  func.func @transform_2(%arg0: i32) -> (i32, i32) {
    %c0_i32 = arith.constant 0 : i32
    %c0_i32_0 = arith.constant 0 : i32
    %c0_i32_1 = arith.constant 0 : i32
    return %c0_i32, %c0_i32_0 : i32, i32
  }
  func.func @transform_3(%arg0: i32) -> (i32, i32) {
    %c0_i32 = arith.constant 0 : i32
    %c0_i32_0 = arith.constant 0 : i32
    %c0_i32_1 = arith.constant 0 : i32
    return %c0_i32, %c0_i32_0 : i32, i32
  }
  func.func @transform_4(%arg0: i32) -> (i32, i32) {
    %c0_i32 = arith.constant 0 : i32
    %c0_i32_0 = arith.constant 0 : i32
    %c0_i32_1 = arith.constant 0 : i32
    return %c0_i32, %c0_i32_0 : i32, i32
  }
  func.func @transform_5(%arg0: i32) -> (i32, i32) {
    %c0_i32 = arith.constant 0 : i32
    %c0_i32_0 = arith.constant 0 : i32
    %c0_i32_1 = arith.constant 0 : i32
    return %c0_i32, %c0_i32_0 : i32, i32
  }
  func.func @transform_6(%arg0: i32) -> (i32, i32) {
    %c0_i32 = arith.constant 0 : i32
    %c0_i32_0 = arith.constant 0 : i32
    %c0_i32_1 = arith.constant 0 : i32
    return %c0_i32, %c0_i32_0 : i32, i32
  }
  func.func @transform_7(%arg0: i32) -> (i32, i32) {
    %c0_i32 = arith.constant 0 : i32
    %c0_i32_0 = arith.constant 0 : i32
    return %arg0, %c0_i32 : i32, i32
  }
}

</mosaic_0001>

<llo_original>
// kernel: tpu_custom_call.1
$region0: #{tpu_custom_call.1}
  #allocation0 [shape = 'u32[]', space=smem, size = 0x4, offset = 0x4, fixed_abs, tag = 'smem constant byte address 0x4 - core index']
  #allocation1 [shape = 'u32[144,128]{1,0:T(1,128)}', space=vmem, size = 0x12000, scoped, tag = 'internal scratch']
  %s0 = inlined_call_operand.vmem [shape: f32[2,128], index: 0, kind: input, shape index: {}]
  %s1 = inlined_call_operand.vmem [shape: bf16[128,128], index: 1, kind: input, shape index: {}]
  %s2 = inlined_call_operand.vmem [shape: f32[1,128], index: 2, kind: input, shape index: {}]
  %s3 = inlined_call_operand.vmem [shape: bf16[128,64], index: 3, kind: input, shape index: {}]
  %s4 = inlined_call_operand.vmem [shape: f32[1,64], index: 4, kind: input, shape index: {}]
  %s5 = inlined_call_operand.vmem [shape: bf16[64,32], index: 5, kind: input, shape index: {}]
  %s6 = inlined_call_operand.vmem [shape: f32[1,32], index: 6, kind: input, shape index: {}]
  %s7 = inlined_call_operand.hbm [shape: f32[32,128], index: 7, kind: output, shape index: {}]
  %s8 = sld [smem:[#allocation0]]
  $region38: #{tpu_custom_call.1} parent=0
    _
  %s10 = ssub.s32 1, %s8
  %s11 = scalar_select 0, %s10, %s8
  $region1: #{tpu_custom_call.1} parent=0
    #allocation2 [shape = 'u8[16384]{0}', space=vmem, size = 0x4000, scoped, tag = 'output window, operand 0, single buffered']
    #allocation3 [shape = 's32[1]{0}', space=sflag, size = 0x4, scoped, tag = 'scoped memory for tpu_custom_call.1']
    %12 = vsyncpa [#allocation3], 0
    // Predicated region
    $region2: #{tpu_custom_call.1} parent=1 // pred_check
      _
    $region3: #{tpu_custom_call.1} parent=1 // pred_check_branch
      %14 = sbr.rel (0) target = $region5
    $region4: #{tpu_custom_call.1} parent=1 // pred_region
      _
    $region5: #{tpu_custom_call.1} parent=1 // pred_fallthru
      _
    // Predicated region
    $region6: #{tpu_custom_call.1} parent=1 // pred_check
      _
    $region7: #{tpu_custom_call.1} parent=1 // pred_check_branch
      %16 = sbr.rel (0) target = $region9
    $region8: #{tpu_custom_call.1} parent=1 // pred_region
      _
    $region9: #{tpu_custom_call.1} parent=1 // pred_fallthru
      _
    // Predicated region
    $region10: #{tpu_custom_call.1} parent=1 // pred_check
      _
    $region11: #{tpu_custom_call.1} parent=1 // pred_check_branch
      %18 = sbr.rel (0) target = $region13
    $region12: #{tpu_custom_call.1} parent=1 // pred_region
      _
    $region13: #{tpu_custom_call.1} parent=1 // pred_fallthru
      _
    // Predicated region
    $region14: #{tpu_custom_call.1} parent=1 // pred_check
      _
    $region15: #{tpu_custom_call.1} parent=1 // pred_check_branch
      %20 = sbr.rel (0) target = $region17
    $region16: #{tpu_custom_call.1} parent=1 // pred_region
      _
    $region17: #{tpu_custom_call.1} parent=1 // pred_fallthru
      _
    // Predicated region
    $region18: #{tpu_custom_call.1} parent=1 // pred_check
      _
    $region19: #{tpu_custom_call.1} parent=1 // pred_check_branch
      %22 = sbr.rel (0) target = $region21
    $region20: #{tpu_custom_call.1} parent=1 // pred_region
      _
    $region21: #{tpu_custom_call.1} parent=1 // pred_fallthru
      _
    // Predicated region
    $region22: #{tpu_custom_call.1} parent=1 // pred_check
      _
    $region23: #{tpu_custom_call.1} parent=1 // pred_check_branch
      %24 = sbr.rel (0) target = $region25
    $region24: #{tpu_custom_call.1} parent=1 // pred_region
      _
    $region25: #{tpu_custom_call.1} parent=1 // pred_fallthru
      _
    // Predicated region
    $region26: #{tpu_custom_call.1} parent=1 // pred_check
      _
    $region27: #{tpu_custom_call.1} parent=1 // pred_check_branch
      %26 = sbr.rel (0) target = $region29
    $region28: #{tpu_custom_call.1} parent=1 // pred_region
      _
    $region29: #{tpu_custom_call.1} parent=1 // pred_fallthru
      _
    %v28 = vld [vmem:[%s1] sm:$0xf]
    %v29 = vld [vmem:[%s1 + $0x4] sm:$0xf]
    %v30 = vld [vmem:[%s1 + $0x8] sm:$0xf]
    %v31 = vld [vmem:[%s1 + $0xc] sm:$0xf]
    %v32 = vld [vmem:[%s1 + $0x10] sm:$0xf]
    %v33 = vld [vmem:[%s1 + $0x14] sm:$0xf]
    %v34 = vld [vmem:[%s1 + $0x18] sm:$0xf]
    %v35 = vld [vmem:[%s1 + $0x1c] sm:$0xf]
    %v36 = vld [vmem:[%s1 + $0x20] sm:$0xf]
    %v37 = vld [vmem:[%s1 + $0x24] sm:$0xf]
    %v38 = vld [vmem:[%s1 + $0x28] sm:$0xf]
    %v39 = vld [vmem:[%s1 + $0x2c] sm:$0xf]
    %v40 = vld [vmem:[%s1 + $0x30] sm:$0xf]
    %v41 = vld [vmem:[%s1 + $0x34] sm:$0xf]
    %v42 = vld [vmem:[%s1 + $0x38] sm:$0xf]
    %v43 = vld [vmem:[%s1 + $0x3c] sm:$0xf]
    %v44 = vld [vmem:[%s3] sm:$0xf]
    %v45 = vld [vmem:[%s3 + $0x4] sm:$0xf]
    %v46 = vld [vmem:[%s3 + $0x8] sm:$0xf]
    %v47 = vld [vmem:[%s3 + $0xc] sm:$0xf]
    %v48 = vld [vmem:[%s3 + $0x10] sm:$0xf]
    %v49 = vld [vmem:[%s3 + $0x14] sm:$0xf]
    %v50 = vld [vmem:[%s3 + $0x18] sm:$0xf]
    %v51 = vld [vmem:[%s3 + $0x1c] sm:$0xf]
    %v52 = vld [vmem:[%s3 + $0x20] sm:$0xf]
    %v53 = vld [vmem:[%s3 + $0x24] sm:$0xf]
    %v54 = vld [vmem:[%s3 + $0x28] sm:$0xf]
    %v55 = vld [vmem:[%s3 + $0x2c] sm:$0xf]
    %v56 = vld [vmem:[%s3 + $0x30] sm:$0xf]
    %v57 = vld [vmem:[%s3 + $0x34] sm:$0xf]
    %v58 = vld [vmem:[%s3 + $0x38] sm:$0xf]
    %v59 = vld [vmem:[%s3 + $0x3c] sm:$0xf]
    %v60 = vld [vmem:[%s5] sm:$0xf]
    %v61 = vld [vmem:[%s5 + $0x4] sm:$0xf]
    %v62 = vld [vmem:[%s5 + $0x8] sm:$0xf]
    %v63 = vld [vmem:[%s5 + $0xc] sm:$0xf]
    %v64 = vld [vmem:[%s5 + $0x10] sm:$0xf]
    %v65 = vld [vmem:[%s5 + $0x14] sm:$0xf]
    %v66 = vld [vmem:[%s5 + $0x18] sm:$0xf]
    %v67 = vld [vmem:[%s5 + $0x1c] sm:$0xf]
    %v68 = vld [vmem:[%s2] sm:$0x1]
    %v69 = vld [vmem:[%s4] sm:$0x1]
    %v70 = vld [vmem:[%s6] sm:$0x1]
    %v71 = vld [vmem:[%s0] sm:$0xff]
    %v72 = vld [vmem:[%s0 + $0x8] sm:$0xff]
    %v73 = vld [vmem:[%s0 + $0x10] sm:$0xff]
    %v74 = vld [vmem:[%s0 + $0x18] sm:$0xff]
    %v75 = vpack.c.bf16 %v72, %v71
    %v76 = vpack.c.bf16 %v74, %v73
    %v78 = vlaneseq
    %v79 = vshrl.u32 %v78, 7
    %v80 = vsub.s32 0, %v79
    %v81 = vrot.slane %v68, %v80
    %v99 = vunpack.c.l.b16 %v28
    %v100 = vunpack.c.l.b16 %v29
    %v101 = vunpack.c.l.b16 %v30
    %v102 = vunpack.c.l.b16 %v31
    %v103 = vunpack.c.l.b16 %v32
    %v104 = vunpack.c.l.b16 %v33
    %v105 = vunpack.c.l.b16 %v34
    %v106 = vunpack.c.l.b16 %v35
    %v107 = vunpack.c.l.b16 %v36
    %v108 = vunpack.c.l.b16 %v37
    %v109 = vunpack.c.l.b16 %v38
    %v110 = vunpack.c.l.b16 %v39
    %v111 = vunpack.c.l.b16 %v40
    %v112 = vunpack.c.l.b16 %v41
    %v113 = vunpack.c.l.b16 %v42
    %v114 = vunpack.c.l.b16 %v43
    %v115 = vpack.c.b16 %v100, %v99
    %v116 = vpack.c.b16 %v102, %v101
    %v117 = vpack.c.b16 %v104, %v103
    %v118 = vpack.c.b16 %v106, %v105
    %v119 = vpack.c.b16 %v108, %v107
    %v120 = vpack.c.b16 %v110, %v109
    %v121 = vpack.c.b16 %v112, %v111
    %v122 = vpack.c.b16 %v114, %v113
    %131 = vmatprep.subr.bf16.mxu0 0
    %132 = vmatpush1.bf16.msra.mxu0 %v122
    %133 = vmatprep.subr.bf16.mxu0 0
    %134 = vmatpush1.bf16.msra.mxu0 %v121
    %135 = vmatprep.subr.bf16.mxu0 0
    %136 = vmatpush1.bf16.msra.mxu0 %v120
    %137 = vmatprep.subr.bf16.mxu0 0
    %138 = vmatpush1.bf16.msra.mxu0 %v119
    %139 = vmatprep.subr.bf16.mxu0 0
    %140 = vmatpush1.bf16.msra.mxu0 %v118
    %141 = vmatprep.subr.bf16.mxu0 0
    %142 = vmatpush1.bf16.msra.mxu0 %v117
    %143 = vmatprep.subr.bf16.mxu0 0
    %144 = vmatpush1.bf16.msra.mxu0 %v116
    %145 = vmatprep.subr.bf16.mxu0 0
    %146 = vmatpush1.bf16.msra.mxu0 %v115
    %147 = vmatprep.subr.bf16.mxu0 0
    %148 = vmatpush2.bf16.msra.mxu0 0
    %149 = vmatprep.subr.bf16.mxu0 0
    %150 = vmatpush2.bf16.msra.mxu0 0
    %151 = vmatprep.subr.bf16.mxu0 0
    %152 = vmatpush2.bf16.msra.mxu0 0
    %153 = vmatprep.subr.bf16.mxu0 0
    %154 = vmatpush2.bf16.msra.mxu0 0
    %155 = vmatprep.subr.bf16.mxu0 0
    %156 = vmatpush2.bf16.msra.mxu0 0
    %157 = vmatprep.subr.bf16.mxu0 0
    %158 = vmatpush2.bf16.msra.mxu0 0
    %159 = vmatprep.subr.bf16.mxu0 0
    %160 = vmatpush2.bf16.msra.mxu0 0
    %161 = vmatprep.subr.bf16.mxu0 0
    %162 = vmatpush2.bf16.msra.mxu0 0
    %163 = vmatprep.mubr.bf16.mxu0 0
    %164 = vmatmul.mubr.bf16.gmra.mxu0 %v75
    %v165 = vpop.f32.mrf.mxu0
    %v166 = vadd.f32 %v81, %v165
    %v167 = vpop.f32.mrf.mxu0
    %v168 = vpop.f32.mrf.mxu0
    %v169 = vadd.f32 %v81, %v168
    %v170 = vpop.f32.mrf.mxu0
    %171 = vmatprep.mubr.bf16.mxu0 0
    %172 = vmatmul.mubr.bf16.gmra.mxu0 %v76
    %v173 = vpop.f32.mrf.mxu0
    %v174 = vadd.f32 %v81, %v173
    %v175 = vpop.f32.mrf.mxu0
    %v176 = vpop.f32.mrf.mxu0
    %v177 = vadd.f32 %v81, %v176
    %v178 = vpop.f32.mrf.mxu0
    %179 = vdwg.mxu0
    %v180 = vmax.f32 %v166, 0.0
    %v181 = vmax.f32 %v169, 0.0
    %v182 = vmax.f32 %v174, 0.0
    %v183 = vmax.f32 %v177, 0.0
    %v184 = vpack.c.bf16 %v181, %v180
    %v185 = vpack.c.bf16 %v183, %v182
    %v187 = vlaneseq
    %v188 = vshrl.u32 %v187, 7
    %v189 = vsub.s32 0, %v188
    %v190 = vrot.slane %v69, %v189
    %v208 = vunpack.c.l.b16 %v44
    %v209 = vunpack.c.l.b16 %v45
    %v210 = vunpack.c.l.b16 %v46
    %v211 = vunpack.c.l.b16 %v47
    %v212 = vunpack.c.l.b16 %v48
    %v213 = vunpack.c.l.b16 %v49
    %v214 = vunpack.c.l.b16 %v50
    %v215 = vunpack.c.l.b16 %v51
    %v216 = vunpack.c.l.b16 %v52
    %v217 = vunpack.c.l.b16 %v53
    %v218 = vunpack.c.l.b16 %v54
    %v219 = vunpack.c.l.b16 %v55
    %v220 = vunpack.c.l.b16 %v56
    %v221 = vunpack.c.l.b16 %v57
    %v222 = vunpack.c.l.b16 %v58
    %v223 = vunpack.c.l.b16 %v59
    %v224 = vpack.c.b16 %v209, %v208
    %v225 = vpack.c.b16 %v211, %v210
    %v226 = vpack.c.b16 %v213, %v212
    %v227 = vpack.c.b16 %v215, %v214
    %v228 = vpack.c.b16 %v217, %v216
    %v229 = vpack.c.b16 %v219, %v218
    %v230 = vpack.c.b16 %v221, %v220
    %v231 = vpack.c.b16 %v223, %v222
    %240 = vmatprep.subr.bf16.mxu0 0
    %241 = vmatpush1.bf16.msra.mxu0 %v231
    %242 = vmatprep.subr.bf16.mxu0 0
    %243 = vmatpush1.bf16.msra.mxu0 %v230
    %244 = vmatprep.subr.bf16.mxu0 0
    %245 = vmatpush1.bf16.msra.mxu0 %v229
    %246 = vmatprep.subr.bf16.mxu0 0
    %247 = vmatpush1.bf16.msra.mxu0 %v228
    %248 = vmatprep.subr.bf16.mxu0 0
    %249 = vmatpush1.bf16.msra.mxu0 %v227
    %250 = vmatprep.subr.bf16.mxu0 0
    %251 = vmatpush1.bf16.msra.mxu0 %v226
    %252 = vmatprep.subr.bf16.mxu0 0
    %253 = vmatpush1.bf16.msra.mxu0 %v225
    %254 = vmatprep.subr.bf16.mxu0 0
    %255 = vmatpush1.bf16.msra.mxu0 %v224
    %256 = vmatprep.subr.bf16.mxu0 0
    %257 = vmatpush2.bf16.msra.mxu0 0
    %258 = vmatprep.subr.bf16.mxu0 0
    %259 = vmatpush2.bf16.msra.mxu0 0
    %260 = vmatprep.subr.bf16.mxu0 0
    %261 = vmatpush2.bf16.msra.mxu0 0
    %262 = vmatprep.subr.bf16.mxu0 0
    %263 = vmatpush2.bf16.msra.mxu0 0
    %264 = vmatprep.subr.bf16.mxu0 0
    %265 = vmatpush2.bf16.msra.mxu0 0
    %266 = vmatprep.subr.bf16.mxu0 0
    %267 = vmatpush2.bf16.msra.mxu0 0
    %268 = vmatprep.subr.bf16.mxu0 0
    %269 = vmatpush2.bf16.msra.mxu0 0
    %270 = vmatprep.subr.bf16.mxu0 0
    %271 = vmatpush2.bf16.msra.mxu0 0
    %272 = vmatprep.mubr.bf16.mxu0 0
    %273 = vmatmul.mubr.bf16.gmra.mxu0 %v184
    %v274 = vpop.f32.mrf.mxu0
    %v275 = vadd.f32 %v190, %v274
    %v276 = vpop.f32.mrf.mxu0
    %v277 = vpop.f32.mrf.mxu0
    %v278 = vadd.f32 %v190, %v277
    %v279 = vpop.f32.mrf.mxu0
    %280 = vmatprep.mubr.bf16.mxu0 0
    %281 = vmatmul.mubr.bf16.gmra.mxu0 %v185
    %v282 = vpop.f32.mrf.mxu0
    %v283 = vadd.f32 %v190, %v282
    %v284 = vpop.f32.mrf.mxu0
    %v285 = vpop.f32.mrf.mxu0
    %v286 = vadd.f32 %v190, %v285
    %v287 = vpop.f32.mrf.mxu0
    %288 = vdwg.mxu0
    %v289 = vmax.f32 %v275, 0.0
    %v290 = vmax.f32 %v278, 0.0
    %v291 = vmax.f32 %v283, 0.0
    %v292 = vmax.f32 %v286, 0.0
    %v293 = vpack.c.bf16 %v290, %v289
    %v294 = vpack.c.bf16 %v292, %v291
    %v296 = vlaneseq
    %v297 = vshrl.u32 %v296, 7
    %v298 = vsub.s32 0, %v297
    %v299 = vrot.slane %v70, %v298
    %v309 = vunpack.c.l.b16 %v60
    %v310 = vunpack.c.l.b16 %v61
    %v311 = vunpack.c.l.b16 %v62
    %v312 = vunpack.c.l.b16 %v63
    %v313 = vunpack.c.l.b16 %v64
    %v314 = vunpack.c.l.b16 %v65
    %v315 = vunpack.c.l.b16 %v66
    %v316 = vunpack.c.l.b16 %v67
    %v317 = vpack.c.b16 %v310, %v309
    %v318 = vpack.c.b16 %v312, %v311
    %v319 = vpack.c.b16 %v314, %v313
    %v320 = vpack.c.b16 %v316, %v315
    %vm325 = vcmask 523264
    %v327 = vsel %vm325, %v293, 0
    %v330 = vsel %vm325, %v294, 0
    %332 = vmatprep.subr.bf16.mxu0 0
    %333 = vmatpush1.bf16.msra.mxu0 0
    %334 = vmatprep.subr.bf16.mxu0 0
    %335 = vmatpush1.bf16.msra.mxu0 0
    %336 = vmatprep.subr.bf16.mxu0 0
    %337 = vmatpush1.bf16.msra.mxu0 0
    %338 = vmatprep.subr.bf16.mxu0 0
    %339 = vmatpush1.bf16.msra.mxu0 0
    %340 = vmatprep.subr.bf16.mxu0 0
    %341 = vmatpush1.bf16.msra.mxu0 %v320
    %342 = vmatprep.subr.bf16.mxu0 0
    %343 = vmatpush1.bf16.msra.mxu0 %v319
    %344 = vmatprep.subr.bf16.mxu0 0
    %345 = vmatpush1.bf16.msra.mxu0 %v318
    %346 = vmatprep.subr.bf16.mxu0 0
    %347 = vmatpush1.bf16.msra.mxu0 %v317
    %348 = vmatprep.subr.bf16.mxu0 0
    %349 = vmatpush2.bf16.msra.mxu0 0
    %350 = vmatprep.subr.bf16.mxu0 0
    %351 = vmatpush2.bf16.msra.mxu0 0
    %352 = vmatprep.subr.bf16.mxu0 0
    %353 = vmatpush2.bf16.msra.mxu0 0
    %354 = vmatprep.subr.bf16.mxu0 0
    %355 = vmatpush2.bf16.msra.mxu0 0
    %356 = vmatprep.subr.bf16.mxu0 0
    %357 = vmatpush2.bf16.msra.mxu0 0
    %358 = vmatprep.subr.bf16.mxu0 0
    %359 = vmatpush2.bf16.msra.mxu0 0
    %360 = vmatprep.subr.bf16.mxu0 0
    %361 = vmatpush2.bf16.msra.mxu0 0
    %362 = vmatprep.subr.bf16.mxu0 0
    %363 = vmatpush2.bf16.msra.mxu0 0
    %364 = vmatprep.mubr.bf16.mxu0 0
    %365 = vmatmul.mubr.bf16.gmra.mxu0 %v327
    %v366 = vpop.f32.mrf.mxu0
    %v367 = vadd.f32 %v299, %v366
    %v368 = vpop.f32.mrf.mxu0
    %v369 = vpop.f32.mrf.mxu0
    %v370 = vadd.f32 %v299, %v369
    %v371 = vpop.f32.mrf.mxu0
    %372 = vmatprep.mubr.bf16.mxu0 0
    %373 = vmatmul.mubr.bf16.gmra.mxu0 %v330
    %v374 = vpop.f32.mrf.mxu0
    %v375 = vadd.f32 %v299, %v374
    %v376 = vpop.f32.mrf.mxu0
    %v377 = vpop.f32.mrf.mxu0
    %v378 = vadd.f32 %v299, %v377
    %v379 = vpop.f32.mrf.mxu0
    %380 = vdwg.mxu0
    %vm381 = vcmask 261120
    %382 = vst.msk [vmem:[#allocation2] sm:$0xff] %vm381, %v367
    %383 = vst.msk [vmem:[#allocation2 + $0x8] sm:$0xff] %vm381, %v370
    %384 = vst.msk [vmem:[#allocation2 + $0x10] sm:$0xff] %vm381, %v375
    %385 = vst.msk [vmem:[#allocation2 + $0x18] sm:$0xff] %vm381, %v378
    %v386 = vld [vmem:[%s0 + $0x20] sm:$0xff]
    %v387 = vld [vmem:[%s0 + $0x28] sm:$0xff]
    %v388 = vld [vmem:[%s0 + $0x30] sm:$0xff]
    %v389 = vld [vmem:[%s0 + $0x38] sm:$0xff]
    %v390 = vpack.c.bf16 %v387, %v386
    %v391 = vpack.c.bf16 %v389, %v388
    %392 = vmatprep.subr.bf16.mxu0 0
    %393 = vmatpush1.bf16.msra.mxu0 %v122
    %394 = vmatprep.subr.bf16.mxu0 0
    %395 = vmatpush1.bf16.msra.mxu0 %v121
    %396 = vmatprep.subr.bf16.mxu0 0
    %397 = vmatpush1.bf16.msra.mxu0 %v120
    %398 = vmatprep.subr.bf16.mxu0 0
    %399 = vmatpush1.bf16.msra.mxu0 %v119
    %400 = vmatprep.subr.bf16.mxu0 0
    %401 = vmatpush1.bf16.msra.mxu0 %v118
    %402 = vmatprep.subr.bf16.mxu0 0
    %403 = vmatpush1.bf16.msra.mxu0 %v117
    %404 = vmatprep.subr.bf16.mxu0 0
    %405 = vmatpush1.bf16.msra.mxu0 %v116
    %406 = vmatprep.subr.bf16.mxu0 0
    %407 = vmatpush1.bf16.msra.mxu0 %v115
    %408 = vmatprep.subr.bf16.mxu0 0
    %409 = vmatpush2.bf16.msra.mxu0 0
    %410 = vmatprep.subr.bf16.mxu0 0
    %411 = vmatpush2.bf16.msra.mxu0 0
    %412 = vmatprep.subr.bf16.mxu0 0
    %413 = vmatpush2.bf16.msra.mxu0 0
    %414 = vmatprep.subr.bf16.mxu0 0
    %415 = vmatpush2.bf16.msra.mxu0 0
    %416 = vmatprep.subr.bf16.mxu0 0
    %417 = vmatpush2.bf16.msra.mxu0 0
    %418 = vmatprep.subr.bf16.mxu0 0
    %419 = vmatpush2.bf16.msra.mxu0 0
    %420 = vmatprep.subr.bf16.mxu0 0
    %421 = vmatpush2.bf16.msra.mxu0 0
    %422 = vmatprep.subr.bf16.mxu0 0
    %423 = vmatpush2.bf16.msra.mxu0 0
    %424 = vmatprep.mubr.bf16.mxu0 0
    %425 = vmatmul.mubr.bf16.gmra.mxu0 %v390
    %v426 = vpop.f32.mrf.mxu0
    %v427 = vadd.f32 %v81, %v426
    %v428 = vpop.f32.mrf.mxu0
    %v429 = vpop.f32.mrf.mxu0
    %v430 = vadd.f32 %v81, %v429
    %v431 = vpop.f32.mrf.mxu0
    %432 = vmatprep.mubr.bf16.mxu0 0
    %433 = vmatmul.mubr.bf16.gmra.mxu0 %v391
    %v434 = vpop.f32.mrf.mxu0
    %v435 = vadd.f32 %v81, %v434
    %v436 = vpop.f32.mrf.mxu0
    %v437 = vpop.f32.mrf.mxu0
    %v438 = vadd.f32 %v81, %v437
    %v439 = vpop.f32.mrf.mxu0
    %440 = vdwg.mxu0
    %v441 = vmax.f32 %v427, 0.0
    %v442 = vmax.f32 %v430, 0.0
    %v443 = vmax.f32 %v435, 0.0
    %v444 = vmax.f32 %v438, 0.0
    %v445 = vpack.c.bf16 %v442, %v441
    %v446 = vpack.c.bf16 %v444, %v443
    %447 = vmatprep.subr.bf16.mxu0 0
    %448 = vmatpush1.bf16.msra.mxu0 %v231
    %449 = vmatprep.subr.bf16.mxu0 0
    %450 = vmatpush1.bf16.msra.mxu0 %v230
    %451 = vmatprep.subr.bf16.mxu0 0
    %452 = vmatpush1.bf16.msra.mxu0 %v229
    %453 = vmatprep.subr.bf16.mxu0 0
    %454 = vmatpush1.bf16.msra.mxu0 %v228
    %455 = vmatprep.subr.bf16.mxu0 0
    %456 = vmatpush1.bf16.msra.mxu0 %v227
    %457 = vmatprep.subr.bf16.mxu0 0
    %458 = vmatpush1.bf16.msra.mxu0 %v226
    %459 = vmatprep.subr.bf16.mxu0 0
    %460 = vmatpush1.bf16.msra.mxu0 %v225
    %461 = vmatprep.subr.bf16.mxu0 0
    %462 = vmatpush1.bf16.msra.mxu0 %v224
    %463 = vmatprep.subr.bf16.mxu0 0
    %464 = vmatpush2.bf16.msra.mxu0 0
    %465 = vmatprep.subr.bf16.mxu0 0
    %466 = vmatpush2.bf16.msra.mxu0 0
    %467 = vmatprep.subr.bf16.mxu0 0
    %468 = vmatpush2.bf16.msra.mxu0 0
    %469 = vmatprep.subr.bf16.mxu0 0
    %470 = vmatpush2.bf16.msra.mxu0 0
    %471 = vmatprep.subr.bf16.mxu0 0
    %472 = vmatpush2.bf16.msra.mxu0 0
    %473 = vmatprep.subr.bf16.mxu0 0
    %474 = vmatpush2.bf16.msra.mxu0 0
    %475 = vmatprep.subr.bf16.mxu0 0
    %476 = vmatpush2.bf16.msra.mxu0 0
    %477 = vmatprep.subr.bf16.mxu0 0
    %478 = vmatpush2.bf16.msra.mxu0 0
    %479 = vmatprep.mubr.bf16.mxu0 0
    %480 = vmatmul.mubr.bf16.gmra.mxu0 %v445
    %v481 = vpop.f32.mrf.mxu0
    %v482 = vadd.f32 %v190, %v481
    %v483 = vpop.f32.mrf.mxu0
    %v484 = vpop.f32.mrf.mxu0
    %v485 = vadd.f32 %v190, %v484
    %v486 = vpop.f32.mrf.mxu0
    %487 = vmatprep.mubr.bf16.mxu0 0
    %488 = vmatmul.mubr.bf16.gmra.mxu0 %v446
    %v489 = vpop.f32.mrf.mxu0
    %v490 = vadd.f32 %v190, %v489
    %v491 = vpop.f32.mrf.mxu0
    %v492 = vpop.f32.mrf.mxu0
    %v493 = vadd.f32 %v190, %v492
    %v494 = vpop.f32.mrf.mxu0
    %495 = vdwg.mxu0
    %v496 = vmax.f32 %v482, 0.0
    %v497 = vmax.f32 %v485, 0.0
    %v498 = vmax.f32 %v490, 0.0
    %v499 = vmax.f32 %v493, 0.0
    %v500 = vpack.c.bf16 %v497, %v496
    %v501 = vpack.c.bf16 %v499, %v498
    %v503 = vsel %vm325, %v500, 0
    %v506 = vsel %vm325, %v501, 0
    %508 = vmatprep.subr.bf16.mxu0 0
    %509 = vmatpush1.bf16.msra.mxu0 0
    %510 = vmatprep.subr.bf16.mxu0 0
    %511 = vmatpush1.bf16.msra.mxu0 0
    %512 = vmatprep.subr.bf16.mxu0 0
    %513 = vmatpush1.bf16.msra.mxu0 0
    %514 = vmatprep.subr.bf16.mxu0 0
    %515 = vmatpush1.bf16.msra.mxu0 0
    %516 = vmatprep.subr.bf16.mxu0 0
    %517 = vmatpush1.bf16.msra.mxu0 %v320
    %518 = vmatprep.subr.bf16.mxu0 0
    %519 = vmatpush1.bf16.msra.mxu0 %v319
    %520 = vmatprep.subr.bf16.mxu0 0
    %521 = vmatpush1.bf16.msra.mxu0 %v318
    %522 = vmatprep.subr.bf16.mxu0 0
    %523 = vmatpush1.bf16.msra.mxu0 %v317
    %524 = vmatprep.subr.bf16.mxu0 0
    %525 = vmatpush2.bf16.msra.mxu0 0
    %526 = vmatprep.subr.bf16.mxu0 0
    %527 = vmatpush2.bf16.msra.mxu0 0
    %528 = vmatprep.subr.bf16.mxu0 0
    %529 = vmatpush2.bf16.msra.mxu0 0
    %530 = vmatprep.subr.bf16.mxu0 0
    %531 = vmatpush2.bf16.msra.mxu0 0
    %532 = vmatprep.subr.bf16.mxu0 0
    %533 = vmatpush2.bf16.msra.mxu0 0
    %534 = vmatprep.subr.bf16.mxu0 0
    %535 = vmatpush2.bf16.msra.mxu0 0
    %536 = vmatprep.subr.bf16.mxu0 0
    %537 = vmatpush2.bf16.msra.mxu0 0
    %538 = vmatprep.subr.bf16.mxu0 0
    %539 = vmatpush2.bf16.msra.mxu0 0
    %540 = vmatprep.mubr.bf16.mxu0 0
    %541 = vmatmul.mubr.bf16.gmra.mxu0 %v503
    %v542 = vpop.f32.mrf.mxu0
    %v543 = vadd.f32 %v299, %v542
    %v544 = vpop.f32.mrf.mxu0
    %v545 = vpop.f32.mrf.mxu0
    %v546 = vadd.f32 %v299, %v545
    %v547 = vpop.f32.mrf.mxu0
    %548 = vmatprep.mubr.bf16.mxu0 0
    %549 = vmatmul.mubr.bf16.gmra.mxu0 %v506
    %v550 = vpop.f32.mrf.mxu0
    %v551 = vadd.f32 %v299, %v550
    %v552 = vpop.f32.mrf.mxu0
    %v553 = vpop.f32.mrf.mxu0
    %v554 = vadd.f32 %v299, %v553
    %v555 = vpop.f32.mrf.mxu0
    %556 = vdwg.mxu0
    %561 = vrot.lane.b32.xlu0 %v543, 32
    %v562 = vpop.permute.xlu0 %561
    %563 = vrot.lane.b32.xlu0 %v546, 32
    %v564 = vpop.permute.xlu0 %563
    %565 = vrot.lane.b32.xlu0 %v551, 32
    %v566 = vpop.permute.xlu0 %565
    %567 = vrot.lane.b32.xlu0 %v554, 32
    %v568 = vpop.permute.xlu0 %567
    %vm573 = vcmask 523520
    %574 = vst.msk [vmem:[#allocation2] sm:$0xff] %vm573, %v562
    %575 = vst.msk [vmem:[#allocation2 + $0x8] sm:$0xff] %vm573, %v564
    %576 = vst.msk [vmem:[#allocation2 + $0x10] sm:$0xff] %vm573, %v566
    %577 = vst.msk [vmem:[#allocation2 + $0x18] sm:$0xff] %vm573, %v568
    %v578 = vld [vmem:[%s0 + $0x40] sm:$0xff]
    %v579 = vld [vmem:[%s0 + $0x48] sm:$0xff]
    %v580 = vld [vmem:[%s0 + $0x50] sm:$0xff]
    %v581 = vld [vmem:[%s0 + $0x58] sm:$0xff]
    %v582 = vpack.c.bf16 %v579, %v578
    %v583 = vpack.c.bf16 %v581, %v580
    %584 = vmatprep.subr.bf16.mxu0 0
    %585 = vmatpush1.bf16.msra.mxu0 %v122
    %586 = vmatprep.subr.bf16.mxu0 0
    %587 = vmatpush1.bf16.msra.mxu0 %v121
    %588 = vmatprep.subr.bf16.mxu0 0
    %589 = vmatpush1.bf16.msra.mxu0 %v120
    %590 = vmatprep.subr.bf16.mxu0 0
    %591 = vmatpush1.bf16.msra.mxu0 %v119
    %592 = vmatprep.subr.bf16.mxu0 0
    %593 = vmatpush1.bf16.msra.mxu0 %v118
    %594 = vmatprep.subr.bf16.mxu0 0
    %595 = vmatpush1.bf16.msra.mxu0 %v117
    %596 = vmatprep.subr.bf16.mxu0 0
    %597 = vmatpush1.bf16.msra.mxu0 %v116
    %598 = vmatprep.subr.bf16.mxu0 0
    %599 = vmatpush1.bf16.msra.mxu0 %v115
    %600 = vmatprep.subr.bf16.mxu0 0
    %601 = vmatpush2.bf16.msra.mxu0 0
    %602 = vmatprep.subr.bf16.mxu0 0
    %603 = vmatpush2.bf16.msra.mxu0 0
    %604 = vmatprep.subr.bf16.mxu0 0
    %605 = vmatpush2.bf16.msra.mxu0 0
    %606 = vmatprep.subr.bf16.mxu0 0
    %607 = vmatpush2.bf16.msra.mxu0 0
    %608 = vmatprep.subr.bf16.mxu0 0
    %609 = vmatpush2.bf16.msra.mxu0 0
    %610 = vmatprep.subr.bf16.mxu0 0
    %611 = vmatpush2.bf16.msra.mxu0 0
    %612 = vmatprep.subr.bf16.mxu0 0
    %613 = vmatpush2.bf16.msra.mxu0 0
    %614 = vmatprep.subr.bf16.mxu0 0
    %615 = vmatpush2.bf16.msra.mxu0 0
    %616 = vmatprep.mubr.bf16.mxu0 0
    %617 = vmatmul.mubr.bf16.gmra.mxu0 %v582
    %v618 = vpop.f32.mrf.mxu0
    %v619 = vadd.f32 %v81, %v618
    %v620 = vpop.f32.mrf.mxu0
    %v621 = vpop.f32.mrf.mxu0
    %v622 = vadd.f32 %v81, %v621
    %v623 = vpop.f32.mrf.mxu0
    %624 = vmatprep.mubr.bf16.mxu0 0
    %625 = vmatmul.mubr.bf16.gmra.mxu0 %v583
    %v626 = vpop.f32.mrf.mxu0
    %v627 = vadd.f32 %v81, %v626
    %v628 = vpop.f32.mrf.mxu0
    %v629 = vpop.f32.mrf.mxu0
    %v630 = vadd.f32 %v81, %v629
    %v631 = vpop.f32.mrf.mxu0
    %632 = vdwg.mxu0
    %v633 = vmax.f32 %v619, 0.0
    %v634 = vmax.f32 %v622, 0.0
    %v635 = vmax.f32 %v627, 0.0
    %v636 = vmax.f32 %v630, 0.0
    %v637 = vpack.c.bf16 %v634, %v633
    %v638 = vpack.c.bf16 %v636, %v635
    %639 = vmatprep.subr.bf16.mxu0 0
    %640 = vmatpush1.bf16.msra.mxu0 %v231
    %641 = vmatprep.subr.bf16.mxu0 0
    %642 = vmatpush1.bf16.msra.mxu0 %v230
    %643 = vmatprep.subr.bf16.mxu0 0
    %644 = vmatpush1.bf16.msra.mxu0 %v229
    %645 = vmatprep.subr.bf16.mxu0 0
    %646 = vmatpush1.bf16.msra.mxu0 %v228
    %647 = vmatprep.subr.bf16.mxu0 0
    %648 = vmatpush1.bf16.msra.mxu0 %v227
    %649 = vmatprep.subr.bf16.mxu0 0
    %650 = vmatpush1.bf16.msra.mxu0 %v226
    %651 = vmatprep.subr.bf16.mxu0 0
    %652 = vmatpush1.bf16.msra.mxu0 %v225
    %653 = vmatprep.subr.bf16.mxu0 0
    %654 = vmatpush1.bf16.msra.mxu0 %v224
    %655 = vmatprep.subr.bf16.mxu0 0
    %656 = vmatpush2.bf16.msra.mxu0 0
    %657 = vmatprep.subr.bf16.mxu0 0
    %658 = vmatpush2.bf16.msra.mxu0 0
    %659 = vmatprep.subr.bf16.mxu0 0
    %660 = vmatpush2.bf16.msra.mxu0 0
    %661 = vmatprep.subr.bf16.mxu0 0
    %662 = vmatpush2.bf16.msra.mxu0 0
    %663 = vmatprep.subr.bf16.mxu0 0
    %664 = vmatpush2.bf16.msra.mxu0 0
    %665 = vmatprep.subr.bf16.mxu0 0
    %666 = vmatpush2.bf16.msra.mxu0 0
    %667 = vmatprep.subr.bf16.mxu0 0
    %668 = vmatpush2.bf16.msra.mxu0 0
    %669 = vmatprep.subr.bf16.mxu0 0
    %670 = vmatpush2.bf16.msra.mxu0 0
    %671 = vmatprep.mubr.bf16.mxu0 0
    %672 = vmatmul.mubr.bf16.gmra.mxu0 %v637
    %v673 = vpop.f32.mrf.mxu0
    %v674 = vadd.f32 %v190, %v673
    %v675 = vpop.f32.mrf.mxu0
    %v676 = vpop.f32.mrf.mxu0
    %v677 = vadd.f32 %v190, %v676
    %v678 = vpop.f32.mrf.mxu0
    %679 = vmatprep.mubr.bf16.mxu0 0
    %680 = vmatmul.mubr.bf16.gmra.mxu0 %v638
    %v681 = vpop.f32.mrf.mxu0
    %v682 = vadd.f32 %v190, %v681
    %v683 = vpop.f32.mrf.mxu0
    %v684 = vpop.f32.mrf.mxu0
    %v685 = vadd.f32 %v190, %v684
    %v686 = vpop.f32.mrf.mxu0
    %687 = vdwg.mxu0
    %v688 = vmax.f32 %v674, 0.0
    %v689 = vmax.f32 %v677, 0.0
    %v690 = vmax.f32 %v682, 0.0
    %v691 = vmax.f32 %v685, 0.0
    %v692 = vpack.c.bf16 %v689, %v688
    %v693 = vpack.c.bf16 %v691, %v690
    %v695 = vsel %vm325, %v692, 0
    %v698 = vsel %vm325, %v693, 0
    %700 = vmatprep.subr.bf16.mxu0 0
    %701 = vmatpush1.bf16.msra.mxu0 0
    %702 = vmatprep.subr.bf16.mxu0 0
    %703 = vmatpush1.bf16.msra.mxu0 0
    %704 = vmatprep.subr.bf16.mxu0 0
    %705 = vmatpush1.bf16.msra.mxu0 0
    %706 = vmatprep.subr.bf16.mxu0 0
    %707 = vmatpush1.bf16.msra.mxu0 0
    %708 = vmatprep.subr.bf16.mxu0 0
    %709 = vmatpush1.bf16.msra.mxu0 %v320
    %710 = vmatprep.subr.bf16.mxu0 0
    %711 = vmatpush1.bf16.msra.mxu0 %v319
    %712 = vmatprep.subr.bf16.mxu0 0
    %713 = vmatpush1.bf16.msra.mxu0 %v318
    %714 = vmatprep.subr.bf16.mxu0 0
    %715 = vmatpush1.bf16.msra.mxu0 %v317
    %716 = vmatprep.subr.bf16.mxu0 0
    %717 = vmatpush2.bf16.msra.mxu0 0
    %718 = vmatprep.subr.bf16.mxu0 0
    %719 = vmatpush2.bf16.msra.mxu0 0
    %720 = vmatprep.subr.bf16.mxu0 0
    %721 = vmatpush2.bf16.msra.mxu0 0
    %722 = vmatprep.subr.bf16.mxu0 0
    %723 = vmatpush2.bf16.msra.mxu0 0
    %724 = vmatprep.subr.bf16.mxu0 0
    %725 = vmatpush2.bf16.msra.mxu0 0
    %726 = vmatprep.subr.bf16.mxu0 0
    %727 = vmatpush2.bf16.msra.mxu0 0
    %728 = vmatprep.subr.bf16.mxu0 0
    %729 = vmatpush2.bf16.msra.mxu0 0
    %730 = vmatprep.subr.bf16.mxu0 0
    %731 = vmatpush2.bf16.msra.mxu0 0
    %732 = vmatprep.mubr.bf16.mxu0 0
    %733 = vmatmul.mubr.bf16.gmra.mxu0 %v695
    %v734 = vpop.f32.mrf.mxu0
    %v735 = vadd.f32 %v299, %v734
    %v736 = vpop.f32.mrf.mxu0
    %v737 = vpop.f32.mrf.mxu0
    %v738 = vadd.f32 %v299, %v737
    %v739 = vpop.f32.mrf.mxu0
    %740 = vmatprep.mubr.bf16.mxu0 0
    %741 = vmatmul.mubr.bf16.gmra.mxu0 %v698
    %v742 = vpop.f32.mrf.mxu0
    %v743 = vadd.f32 %v299, %v742
    %v744 = vpop.f32.mrf.mxu0
    %v745 = vpop.f32.mrf.mxu0
    %v746 = vadd.f32 %v299, %v745
    %v747 = vpop.f32.mrf.mxu0
    %748 = vdwg.mxu0
    %753 = vrot.lane.b32.xlu0 %v735, 64
    %v754 = vpop.permute.xlu0 %753
    %755 = vrot.lane.b32.xlu0 %v738, 64
    %v756 = vpop.permute.xlu0 %755
    %757 = vrot.lane.b32.xlu0 %v743, 64
    %v758 = vpop.permute.xlu0 %757
    %759 = vrot.lane.b32.xlu0 %v746, 64
    %v760 = vpop.permute.xlu0 %759
    %vm765 = vcmask 785920
    %766 = vst.msk [vmem:[#allocation2] sm:$0xff] %vm765, %v754
    %767 = vst.msk [vmem:[#allocation2 + $0x8] sm:$0xff] %vm765, %v756
    %768 = vst.msk [vmem:[#allocation2 + $0x10] sm:$0xff] %vm765, %v758
    %769 = vst.msk [vmem:[#allocation2 + $0x18] sm:$0xff] %vm765, %v760
    %v770 = vld [vmem:[%s0 + $0x60] sm:$0xff]
    %v771 = vld [vmem:[%s0 + $0x68] sm:$0xff]
    %v772 = vld [vmem:[%s0 + $0x70] sm:$0xff]
    %v773 = vld [vmem:[%s0 + $0x78] sm:$0xff]
    %v774 = vpack.c.bf16 %v771, %v770
    %v775 = vpack.c.bf16 %v773, %v772
    %776 = vmatprep.subr.bf16.mxu0 0
    %777 = vmatpush1.bf16.msra.mxu0 %v122
    %778 = vmatprep.subr.bf16.mxu0 0
    %779 = vmatpush1.bf16.msra.mxu0 %v121
    %780 = vmatprep.subr.bf16.mxu0 0
    %781 = vmatpush1.bf16.msra.mxu0 %v120
    %782 = vmatprep.subr.bf16.mxu0 0
    %783 = vmatpush1.bf16.msra.mxu0 %v119
    %784 = vmatprep.subr.bf16.mxu0 0
    %785 = vmatpush1.bf16.msra.mxu0 %v118
    %786 = vmatprep.subr.bf16.mxu0 0
    %787 = vmatpush1.bf16.msra.mxu0 %v117
    %788 = vmatprep.subr.bf16.mxu0 0
    %789 = vmatpush1.bf16.msra.mxu0 %v116
    %790 = vmatprep.subr.bf16.mxu0 0
    %791 = vmatpush1.bf16.msra.mxu0 %v115
    %792 = vmatprep.subr.bf16.mxu0 0
    %793 = vmatpush2.bf16.msra.mxu0 0
    %794 = vmatprep.subr.bf16.mxu0 0
    %795 = vmatpush2.bf16.msra.mxu0 0
    %796 = vmatprep.subr.bf16.mxu0 0
    %797 = vmatpush2.bf16.msra.mxu0 0
    %798 = vmatprep.subr.bf16.mxu0 0
    %799 = vmatpush2.bf16.msra.mxu0 0
    %800 = vmatprep.subr.bf16.mxu0 0
    %801 = vmatpush2.bf16.msra.mxu0 0
    %802 = vmatprep.subr.bf16.mxu0 0
    %803 = vmatpush2.bf16.msra.mxu0 0
    %804 = vmatprep.subr.bf16.mxu0 0
    %805 = vmatpush2.bf16.msra.mxu0 0
    %806 = vmatprep.subr.bf16.mxu0 0
    %807 = vmatpush2.bf16.msra.mxu0 0
    %808 = vmatprep.mubr.bf16.mxu0 0
    %809 = vmatmul.mubr.bf16.gmra.mxu0 %v774
    %v810 = vpop.f32.mrf.mxu0
    %v811 = vadd.f32 %v81, %v810
    %v812 = vpop.f32.mrf.mxu0
    %v813 = vpop.f32.mrf.mxu0
    %v814 = vadd.f32 %v81, %v813
    %v815 = vpop.f32.mrf.mxu0
    %816 = vmatprep.mubr.bf16.mxu0 0
    %817 = vmatmul.mubr.bf16.gmra.mxu0 %v775
    %v818 = vpop.f32.mrf.mxu0
    %v819 = vadd.f32 %v81, %v818
    %v820 = vpop.f32.mrf.mxu0
    %v821 = vpop.f32.mrf.mxu0
    %v822 = vadd.f32 %v81, %v821
    %v823 = vpop.f32.mrf.mxu0
    %824 = vdwg.mxu0
    %v825 = vmax.f32 %v811, 0.0
    %v826 = vmax.f32 %v814, 0.0
    %v827 = vmax.f32 %v819, 0.0
    %v828 = vmax.f32 %v822, 0.0
    %v829 = vpack.c.bf16 %v826, %v825
    %v830 = vpack.c.bf16 %v828, %v827
    %831 = vmatprep.subr.bf16.mxu0 0
    %832 = vmatpush1.bf16.msra.mxu0 %v231
    %833 = vmatprep.subr.bf16.mxu0 0
    %834 = vmatpush1.bf16.msra.mxu0 %v230
    %835 = vmatprep.subr.bf16.mxu0 0
    %836 = vmatpush1.bf16.msra.mxu0 %v229
    %837 = vmatprep.subr.bf16.mxu0 0
    %838 = vmatpush1.bf16.msra.mxu0 %v228
    %839 = vmatprep.subr.bf16.mxu0 0
    %840 = vmatpush1.bf16.msra.mxu0 %v227
    %841 = vmatprep.subr.bf16.mxu0 0
    %842 = vmatpush1.bf16.msra.mxu0 %v226
    %843 = vmatprep.subr.bf16.mxu0 0
    %844 = vmatpush1.bf16.msra.mxu0 %v225
    %845 = vmatprep.subr.bf16.mxu0 0
    %846 = vmatpush1.bf16.msra.mxu0 %v224
    %847 = vmatprep.subr.bf16.mxu0 0
    %848 = vmatpush2.bf16.msra.mxu0 0
    %849 = vmatprep.subr.bf16.mxu0 0
    %850 = vmatpush2.bf16.msra.mxu0 0
    %851 = vmatprep.subr.bf16.mxu0 0
    %852 = vmatpush2.bf16.msra.mxu0 0
    %853 = vmatprep.subr.bf16.mxu0 0
    %854 = vmatpush2.bf16.msra.mxu0 0
    %855 = vmatprep.subr.bf16.mxu0 0
    %856 = vmatpush2.bf16.msra.mxu0 0
    %857 = vmatprep.subr.bf16.mxu0 0
    %858 = vmatpush2.bf16.msra.mxu0 0
    %859 = vmatprep.subr.bf16.mxu0 0
    %860 = vmatpush2.bf16.msra.mxu0 0
    %861 = vmatprep.subr.bf16.mxu0 0
    %862 = vmatpush2.bf16.msra.mxu0 0
    %863 = vmatprep.mubr.bf16.mxu0 0
    %864 = vmatmul.mubr.bf16.gmra.mxu0 %v829
    %v865 = vpop.f32.mrf.mxu0
    %v866 = vadd.f32 %v190, %v865
    %v867 = vpop.f32.mrf.mxu0
    %v868 = vpop.f32.mrf.mxu0
    %v869 = vadd.f32 %v190, %v868
    %v870 = vpop.f32.mrf.mxu0
    %871 = vmatprep.mubr.bf16.mxu0 0
    %872 = vmatmul.mubr.bf16.gmra.mxu0 %v830
    %v873 = vpop.f32.mrf.mxu0
    %v874 = vadd.f32 %v190, %v873
    %v875 = vpop.f32.mrf.mxu0
    %v876 = vpop.f32.mrf.mxu0
    %v877 = vadd.f32 %v190, %v876
    %v878 = vpop.f32.mrf.mxu0
    %879 = vdwg.mxu0
    %v880 = vmax.f32 %v866, 0.0
    %v881 = vmax.f32 %v869, 0.0
    %v882 = vmax.f32 %v874, 0.0
    %v883 = vmax.f32 %v877, 0.0
    %v884 = vpack.c.bf16 %v881, %v880
    %v885 = vpack.c.bf16 %v883, %v882
    %v887 = vsel %vm325, %v884, 0
    %v890 = vsel %vm325, %v885, 0
    %892 = vmatprep.subr.bf16.mxu0 0
    %893 = vmatpush1.bf16.msra.mxu0 0
    %894 = vmatprep.subr.bf16.mxu0 0
    %895 = vmatpush1.bf16.msra.mxu0 0
    %896 = vmatprep.subr.bf16.mxu0 0
    %897 = vmatpush1.bf16.msra.mxu0 0
    %898 = vmatprep.subr.bf16.mxu0 0
    %899 = vmatpush1.bf16.msra.mxu0 0
    %900 = vmatprep.subr.bf16.mxu0 0
    %901 = vmatpush1.bf16.msra.mxu0 %v320
    %902 = vmatprep.subr.bf16.mxu0 0
    %903 = vmatpush1.bf16.msra.mxu0 %v319
    %904 = vmatprep.subr.bf16.mxu0 0
    %905 = vmatpush1.bf16.msra.mxu0 %v318
    %906 = vmatprep.subr.bf16.mxu0 0
    %907 = vmatpush1.bf16.msra.mxu0 %v317
    %908 = vmatprep.subr.bf16.mxu0 0
    %909 = vmatpush2.bf16.msra.mxu0 0
    %910 = vmatprep.subr.bf16.mxu0 0
    %911 = vmatpush2.bf16.msra.mxu0 0
    %912 = vmatprep.subr.bf16.mxu0 0
    %913 = vmatpush2.bf16.msra.mxu0 0
    %914 = vmatprep.subr.bf16.mxu0 0
    %915 = vmatpush2.bf16.msra.mxu0 0
    %916 = vmatprep.subr.bf16.mxu0 0
    %917 = vmatpush2.bf16.msra.mxu0 0
    %918 = vmatprep.subr.bf16.mxu0 0
    %919 = vmatpush2.bf16.msra.mxu0 0
    %920 = vmatprep.subr.bf16.mxu0 0
    %921 = vmatpush2.bf16.msra.mxu0 0
    %922 = vmatprep.subr.bf16.mxu0 0
    %923 = vmatpush2.bf16.msra.mxu0 0
    %924 = vmatprep.mubr.bf16.mxu0 0
    %925 = vmatmul.mubr.bf16.gmra.mxu0 %v887
    %v926 = vpop.f32.mrf.mxu0
    %v927 = vadd.f32 %v299, %v926
    %v928 = vpop.f32.mrf.mxu0
    %v929 = vpop.f32.mrf.mxu0
    %v930 = vadd.f32 %v299, %v929
    %v931 = vpop.f32.mrf.mxu0
    %932 = vmatprep.mubr.bf16.mxu0 0
    %933 = vmatmul.mubr.bf16.gmra.mxu0 %v890
    %v934 = vpop.f32.mrf.mxu0
    %v935 = vadd.f32 %v299, %v934
    %v936 = vpop.f32.mrf.mxu0
    %v937 = vpop.f32.mrf.mxu0
    %v938 = vadd.f32 %v299, %v937
    %v939 = vpop.f32.mrf.mxu0
    %940 = vdwg.mxu0
    %945 = vrot.lane.b32.xlu0 %v927, 96
    %v946 = vpop.permute.xlu0 %945
    %947 = vrot.lane.b32.xlu0 %v930, 96
    %v948 = vpop.permute.xlu0 %947
    %949 = vrot.lane.b32.xlu0 %v935, 96
    %v950 = vpop.permute.xlu0 %949
    %951 = vrot.lane.b32.xlu0 %v938, 96
    %v952 = vpop.permute.xlu0 %951
    %vm957 = vcmask 1048320
    %958 = vst.msk [vmem:[#allocation2] sm:$0xff] %vm957, %v946
    %959 = vst.msk [vmem:[#allocation2 + $0x8] sm:$0xff] %vm957, %v948
    %960 = vst.msk [vmem:[#allocation2 + $0x10] sm:$0xff] %vm957, %v950
    %961 = vst.msk [vmem:[#allocation2 + $0x18] sm:$0xff] %vm957, %v952
    // Predicated region
    $region30: #{tpu_custom_call.1} parent=1 // pred_check
      _
    $region31: #{tpu_custom_call.1} parent=1 // pred_check_branch
      %963 = sbr.rel (0) target = $region33
    $region32: #{tpu_custom_call.1} parent=1 // pred_region
      %s965 = ssub.s32 512, 512
      %966 = vsyncadd [#allocation3], %s965
      %s967 = sshll.u32 [#allocation2], 4
      %s968 = int_to_ptr.vmem [resolvable:$true] %s967
      %973 = dma.vmem_to_hbm [thread:$0]  %s968, 512, %s7, [#allocation3], 128, 128, 8
    $region33: #{tpu_custom_call.1} parent=1 // pred_fallthru
      _
    // Predicated region
    $region34: #{tpu_custom_call.1} parent=1 // pred_check
      _
    $region35: #{tpu_custom_call.1} parent=1 // pred_check_branch
      %975 = sbr.rel (0) target = $region37
    $region36: #{tpu_custom_call.1} parent=1 // pred_region
      %976 = dma.done [#allocation3], 512
    $region37: #{tpu_custom_call.1} parent=1 // pred_fallthru
      _
    %977 = vsyncpa [#allocation3], 1

</llo_original>
